<compile_context>
chip_gen: v6e
topology: v6e:2x2x1
jax: 0.10.0
libtpu: 0.0.40
codegen_flags: <defaults>
</compile_context>

<pallas_src>
import math
import functools

import jax
import jax.numpy as jnp
from jax.experimental import pallas as pl
from jax.experimental.pallas import tpu as pltpu


# ----------------------------------------------------------------------------
# Kernel 1: tiled linear  y = x @ w_t + b
#   w_t is the PRE-transposed weight (D_in, D_out) — torch nn.Linear weights are
#   transposed once outside the kernel so the MXU is fed with no in-kernel relayout.
# ----------------------------------------------------------------------------
def _linear_kernel(x_ref, w_ref, b_ref, o_ref, acc_ref):
    @pl.when(pl.program_id(2) == 0)
    def _init():
        acc_ref[...] = jnp.zeros_like(acc_ref)

    acc_ref[...] += jnp.dot(x_ref[...], w_ref[...],
                            preferred_element_type=jnp.float32)

    @pl.when(pl.program_id(2) == pl.num_programs(2) - 1)
    def _finalize():
        o_ref[...] = (acc_ref[...] + b_ref[...]).astype(o_ref.dtype)


def _pick_tile(dim, tile):
    # Use the requested tile when it divides the dim; otherwise fall back to the
    # full extent (full-extent blocks always satisfy the (8,128) tiling rule).
    return tile if (dim >= tile and dim % tile == 0) else dim


def pallas_linear(x2d, w_t, b, *, tm=256, tn=256, tk=512):
    """y = x2d @ w_t + b, tiled with a VMEM f32 accumulator and pipelined grid."""
    M, K = x2d.shape
    K2, N = w_t.shape
    assert K == K2
    tm, tn, tk = _pick_tile(M, tm), _pick_tile(N, tn), _pick_tile(K, tk)
    grid = (M // tm, N // tn, K // tk)
    return pl.pallas_call(
        _linear_kernel,
        out_shape=jax.ShapeDtypeStruct((M, N), jnp.float32),
        grid=grid,
        in_specs=[
            pl.BlockSpec((tm, tk), lambda i, j, k: (i, k)),
            pl.BlockSpec((tk, tn), lambda i, j, k: (k, j)),
            pl.BlockSpec((1, tn), lambda i, j, k: (0, j)),
        ],
        out_specs=pl.BlockSpec((tm, tn), lambda i, j, k: (i, j)),
        scratch_shapes=[pltpu.VMEM((tm, tn), jnp.float32)],
        compiler_params=pltpu.CompilerParams(
            dimension_semantics=("parallel", "parallel", "arbitrary")),
    )(x2d, w_t, b.reshape(1, N))


# ----------------------------------------------------------------------------
# Kernel 2: attention for ALL heads of one batch element per grid step.
#   qkv block: (1, 3, H, S, d_k)  (query already pre-scaled by 1/sqrt(d_k))
#   optional additive mask bias:   (1, 1, S, S)  (0 where attended, -1e9 where masked)
#   outputs: attn_out (1, H, S, d_k) and optionally probabilities (1, H, S, S)
# ----------------------------------------------------------------------------
def _attention_kernel(*refs, has_bias, return_probs):
    refs = list(refs)
    qkv_ref = refs.pop(0)
    bias_ref = refs.pop(0) if has_bias else None
    o_ref = refs.pop(0)
    p_ref = refs.pop(0) if return_probs else None

    q = qkv_ref[0, 0]                         # (H, S, d_k)
    k = qkv_ref[0, 1]
    v = qkv_ref[0, 2]

    # scores for all heads at once (batched over heads on the leading axis)
    s = jnp.einsum("hqd,hkd->hqk", q, k, preferred_element_type=jnp.float32)
    if has_bias:
        s = s + bias_ref[0, 0]                # (S, S) additive bias, broadcasts over H

    # numerically-stable softmax along the key axis
    s_max = jnp.max(s, axis=-1, keepdims=True)
    e = jnp.exp(s - s_max)
    denom = jnp.sum(e, axis=-1, keepdims=True)
    p = e * pl.reciprocal(denom, approx=True)     # EUP reciprocal (approx)

    o = jnp.einsum("hqk,hkd->hqd", p, v, preferred_element_type=jnp.float32)
    o_ref[0] = o.astype(o_ref.dtype)              # (H, S, d_k)
    if return_probs:
        p_ref[0] = p.astype(p_ref.dtype)          # (H, S, S)


def pallas_attention(qkv, attn_bias=None, *, return_probs=True):
    B, three, H, S, d_k = qkv.shape
    assert three == 3

    kernel = functools.partial(_attention_kernel,
                               has_bias=attn_bias is not None,
                               return_probs=return_probs)

    in_specs = [pl.BlockSpec((1, 3, H, S, d_k), lambda b: (b, 0, 0, 0, 0))]
    args = [qkv]
    if attn_bias is not None:
        in_specs.append(pl.BlockSpec((1, 1, S, S), lambda b: (b, 0, 0, 0)))
        args.append(attn_bias)

    out_shapes = [jax.ShapeDtypeStruct((B, H, S, d_k), jnp.float32)]
    out_specs = [pl.BlockSpec((1, H, S, d_k), lambda b: (b, 0, 0, 0))]
    if return_probs:
        # TODO(synk): for long sequences write probabilities as bf16 (or drop them)
        # and move to a KV-tiled online-softmax (flash) layout.
        out_shapes.append(jax.ShapeDtypeStruct((B, H, S, S), jnp.float32))
        out_specs.append(pl.BlockSpec((1, H, S, S), lambda b: (b, 0, 0, 0)))

    outs = pl.pallas_call(
        kernel,
        out_shape=tuple(out_shapes),
        grid=(B,),
        in_specs=in_specs,
        out_specs=tuple(out_specs),
        compiler_params=pltpu.CompilerParams(dimension_semantics=("parallel",)),
    )(*args)

    if return_probs:
        return outs[0], outs[1]
    return outs[0], None


# ----------------------------------------------------------------------------
# Kernel 3: fused "merge heads + W_o projection + bias".
#   out[b, s, :] = sum_h attn[b, h, s, :] @ W_o^T[h]  + b_o
#   -> no transpose / reshape of the attention output anywhere.
# ----------------------------------------------------------------------------
def _merge_out_proj_kernel(x_ref, w_ref, b_ref, o_ref):
    H = x_ref.shape[1]
    S = x_ref.shape[2]
    D = w_ref.shape[-1]
    acc = jnp.zeros((S, D), jnp.float32)
    for h in range(H):                       # static unroll over heads
        acc = acc + jnp.dot(x_ref[0, h], w_ref[h],
                            preferred_element_type=jnp.float32)
    o_ref[0] = (acc + b_ref[...]).astype(o_ref.dtype)


def pallas_merge_out_proj(attn_out, w_o_heads, b_o):
    B, H, S, d_k = attn_out.shape
    D = w_o_heads.shape[-1]
    return pl.pallas_call(
        _merge_out_proj_kernel,
        out_shape=jax.ShapeDtypeStruct((B, S, D), jnp.float32),
        grid=(B,),
        in_specs=[
            pl.BlockSpec((1, H, S, d_k), lambda b: (b, 0, 0, 0)),
            pl.BlockSpec((H, d_k, D), lambda b: (0, 0, 0)),
            pl.BlockSpec((1, D), lambda b: (0, 0)),
        ],
        out_specs=pl.BlockSpec((1, S, D), lambda b: (b, 0, 0)),
        compiler_params=pltpu.CompilerParams(dimension_semantics=("parallel",)),
    )(attn_out, w_o_heads, b_o.reshape(1, D))


# ----------------------------------------------------------------------------
# Full MultiHeadAttention forward
# ----------------------------------------------------------------------------
def multi_head_attention(params, q, k, v, mask=None, *, n_heads, return_scores=True):
    """Forward pass equivalent to the PyTorch module.

    params follow torch nn.Linear convention: W_* (out, in), b_* (out,).
    Returns (output (B, S, D), attention_scores (B, H, S, S) or None).
    """
    B, S, D = q.shape
    assert D % n_heads == 0
    d_k = D // n_heads
    scale = jnp.float32(1.0 / math.sqrt(d_k))

    # Host-side (one-time / constant-foldable under jit) weight prep:
    # pre-transpose, fold 1/sqrt(d_k) into the query projection.
    w_q_t = (params["W_q"] * scale).T                     # (D, D)
    w_k_t = params["W_k"].T
    w_v_t = params["W_v"].T
    w_o_heads = params["W_o"].T.reshape(n_heads, d_k, D)  # (H, d_k, D)

    if (q is k) and (k is v):
        # Self-attention: one fused (B*S, D) @ (D, 3D) projection, x read once.
        w_qkv_t = jnp.concatenate([w_q_t, w_k_t, w_v_t], axis=1)          # (D, 3D)
        b_qkv = jnp.concatenate([params["b_q"] * scale,
                                 params["b_k"], params["b_v"]])           # (3D,)
        qkv_flat = pallas_linear(q.reshape(B * S, D), w_qkv_t, b_qkv)     # (B*S, 3D)
    else:
        # Cross-attention fallback: three projections, then concatenate.
        # TODO(synk): could be a single pallas_call over stacked inputs/weights.
        q_p = pallas_linear(q.reshape(B * S, D), w_q_t, params["b_q"] * scale)
        k_p = pallas_linear(k.reshape(B * S, D), w_k_t, params["b_k"])
        v_p = pallas_linear(v.reshape(B * S, D), w_v_t, params["b_v"])
        qkv_flat = jnp.concatenate([q_p, k_p, v_p], axis=-1)

    # (B*S, 3D) -> (B, 3, H, S, d_k): one layout transpose (replaces the four
    # split/merge-heads transposes of the naive implementation).
    qkv = qkv_flat.reshape(B, S, 3, n_heads, d_k).transpose(0, 2, 3, 1, 4)

    # Optional mask -> additive bias. Nothing is built or DMA'd when mask is None.
    attn_bias = None
    if mask is not None:
        mask_b = jnp.broadcast_to(jnp.asarray(mask), (B, 1, S, S))
        attn_bias = jnp.where(mask_b == 0, jnp.float32(-1e9), jnp.float32(0.0))

    # TODO(synk): dropout on attention probabilities is omitted (eval-mode semantics).
    attn_out, attn_probs = pallas_attention(qkv, attn_bias, return_probs=return_scores)

    out = pallas_merge_out_proj(attn_out, w_o_heads, params["b_o"])
    return out, attn_probs


# ----------------------------------------------------------------------------
# Pure-JAX reference for verification
# ----------------------------------------------------------------------------
def reference_mha(params, q, k, v, mask=None, *, n_heads):
    B, S, D = q.shape
    d_k = D // n_heads

    def lin(x, w, b):
        return x @ w.T + b

    def split(x):
        return x.reshape(B, S, n_heads, d_k).transpose(0, 2, 1, 3)

    query = split(lin(q, params["W_q"], params["b_q"]))
    key = split(lin(k, params["W_k"], params["b_k"]))
    value = split(lin(v, params["W_v"], params["b_v"]))

    s = jnp.einsum("bhqd,bhkd->bhqk", query, key) / math.sqrt(d_k)
    if mask is not None:
        s = jnp.where(jnp.broadcast_to(jnp.asarray(mask), (B, 1, S, S)) == 0, -1e9, s)
    p = jax.nn.softmax(s, axis=-1)
    x = jnp.einsum("bhqk,bhkd->bhqd", p, value)
    x = x.transpose(0, 2, 1, 3).reshape(B, S, D)
    return lin(x, params["W_o"], params["b_o"]), p


if __name__ == "__main__":
    # Small deterministic problem: batch=2, seq=8, d_model=32, heads=4 (d_k=8)
    B, S, D, H = 2, 8, 32, 4

    key = jax.random.PRNGKey(0)
    ks = jax.random.split(key, 12)

    init_scale = 1.0 / math.sqrt(D)
    params = {
        "W_q": jax.random.uniform(ks[0], (D, D), jnp.float32, -init_scale, init_scale),
        "b_q": jax.random.uniform(ks[1], (D,), jnp.float32, -init_scale, init_scale),
        "W_k": jax.random.uniform(ks[2], (D, D), jnp.float32, -init_scale, init_scale),
        "b_k": jax.random.uniform(ks[3], (D,), jnp.float32, -init_scale, init_scale),
        "W_v": jax.random.uniform(ks[4], (D, D), jnp.float32, -init_scale, init_scale),
        "b_v": jax.random.uniform(ks[5], (D,), jnp.float32, -init_scale, init_scale),
        "W_o": jax.random.uniform(ks[6], (D, D), jnp.float32, -init_scale, init_scale),
        "b_o": jax.random.uniform(ks[7], (D,), jnp.float32, -init_scale, init_scale),
    }

    x_in = jax.random.normal(ks[8], (B, S, D), jnp.float32)
    k_in = jax.random.normal(ks[9], (B, S, D), jnp.float32)
    v_in = jax.random.normal(ks[10], (B, S, D), jnp.float32)

    # Tolerance is loosened slightly because the softmax denominator uses the
    # hardware approximate reciprocal (EUP); real bugs would show O(1) errors.
    tol = dict(atol=2e-2, rtol=2e-2)

    # 1) self-attention, no mask (fused QKV path, no-mask kernel variant)
    out, scores = multi_head_attention(params, x_in, x_in, x_in, mask=None, n_heads=H)
    out = jax.block_until_ready(out)
    scores = jax.block_until_ready(scores)
    ref_out, ref_scores = reference_mha(params, x_in, x_in, x_in, mask=None, n_heads=H)
    assert out.shape == (B, S, D) and scores.shape == (B, H, S, S)
    assert jnp.allclose(out, ref_out, **tol), "self-attn output mismatch"
    assert jnp.allclose(scores, ref_scores, **tol), "self-attn scores mismatch"

    # 2) self-attention with a causal mask (additive-bias kernel variant)
    causal = jnp.tril(jnp.ones((S, S), jnp.int32)).reshape(1, 1, S, S)
    out_m, scores_m = multi_head_attention(params, x_in, x_in, x_in, mask=causal, n_heads=H)
    out_m = jax.block_until_ready(out_m)
    ref_out_m, ref_scores_m = reference_mha(params, x_in, x_in, x_in, mask=causal, n_heads=H)
    assert jnp.allclose(out_m, ref_out_m, **tol), "masked output mismatch"
    assert jnp.allclose(scores_m, ref_scores_m, **tol), "masked scores mismatch"

    # 3) cross-attention (distinct q/k/v), probabilities output disabled
    out_x, scores_x = multi_head_attention(params, x_in, k_in, v_in, mask=None,
                                           n_heads=H, return_scores=False)
    out_x = jax.block_until_ready(out_x)
    ref_out_x, _ = reference_mha(params, x_in, k_in, v_in, mask=None, n_heads=H)
    assert scores_x is None
    assert jnp.allclose(out_x, ref_out_x, **tol), "cross-attn output mismatch"

    print("KERNEL_OK")
</pallas_src>

<mosaic_0001>
module attributes {stable_mosaic.version = 11 : i64} {
  func.func @_linear_kernel(%arg0: i32, %arg1: i32, %arg2: i32, %arg3: memref<16x32xf32, #tpu.memory_space<vmem>>, %arg4: memref<32x96xf32, #tpu.memory_space<vmem>>, %arg5: memref<1x96xf32, #tpu.memory_space<vmem>>, %arg6: memref<16x96xf32, #tpu.memory_space<vmem>>, %arg7: memref<16x96xf32, #tpu.memory_space<vmem>>) attributes {dimension_semantics = [#tpu.dimension_semantics<parallel>, #tpu.dimension_semantics<parallel>, #tpu.dimension_semantics<arbitrary>], iteration_bounds = array<i64: 1, 1, 1>, scalar_prefetch = 0 : i64, scratch_operands = 1 : i64, tpu.core_type = #tpu.core_type<tc>, window_params = [{transform_indices = @transform_0, window_bounds = array<i64: 16, 32>}, {transform_indices = @transform_1, window_bounds = array<i64: 32, 96>}, {transform_indices = @transform_2, window_bounds = array<i64: 1, 96>}, {transform_indices = @transform_3, window_bounds = array<i64: 16, 96>}]} {
    %c0_i32 = arith.constant 0 : i32
    %0 = arith.cmpi eq, %arg2, %c0_i32 : i32
    %1 = arith.extui %0 : i1 to i32
    %c0_i32_0 = arith.constant 0 : i32
    %2 = arith.cmpi ne, %1, %c0_i32_0 : i32
    scf.if %2 {
      %cst_10 = arith.constant 0.000000e+00 : f32
      %12 = vector.broadcast %cst_10 : f32 to vector<16x96xf32>
      %c0_11 = arith.constant 0 : index
      %c0_12 = arith.constant 0 : index
      %13 = vector.load %arg7[%c0_11, %c0_12] : memref<16x96xf32, #tpu.memory_space<vmem>>, vector<16x96xf32>
      tpu.vector_store %arg7[%c0_11, %c0_12], %12 {strides = array<i32>} : memref<16x96xf32, #tpu.memory_space<vmem>>, vector<16x96xf32>,
    } else {
    }
    %c0 = arith.constant 0 : index
    %c0_1 = arith.constant 0 : index
    %3 = vector.load %arg7[%c0, %c0_1] : memref<16x96xf32, #tpu.memory_space<vmem>>, vector<16x96xf32>
    %c0_2 = arith.constant 0 : index
    %c0_3 = arith.constant 0 : index
    %4 = vector.load %arg3[%c0_2, %c0_3] : memref<16x32xf32, #tpu.memory_space<vmem>>, vector<16x32xf32>
    %c0_4 = arith.constant 0 : index
    %c0_5 = arith.constant 0 : index
    %5 = vector.load %arg4[%c0_4, %c0_5] : memref<32x96xf32, #tpu.memory_space<vmem>>, vector<32x96xf32>
    %cst = arith.constant dense<0.000000e+00> : vector<16x96xf32>
    %6 = tpu.matmul %4, %5, %cst {dimension_numbers = #tpu.dot_dimension_numbers<[1], [0], [0], [1], [0, 0, 1, 1], [], []>} : vector<16x32xf32>, vector<32x96xf32>, vector<16x96xf32> -> vector<16x96xf32>
    %7 = arith.addf %3, %6 : vector<16x96xf32>
    %c0_6 = arith.constant 0 : index
    %c0_7 = arith.constant 0 : index
    %8 = vector.load %arg7[%c0_6, %c0_7] : memref<16x96xf32, #tpu.memory_space<vmem>>, vector<16x96xf32>
    tpu.vector_store %arg7[%c0_6, %c0_7], %7 {strides = array<i32>} : memref<16x96xf32, #tpu.memory_space<vmem>>, vector<16x96xf32>,
    %c0_i32_8 = arith.constant 0 : i32
    %9 = arith.cmpi eq, %arg2, %c0_i32_8 : i32
    %10 = arith.extui %9 : i1 to i32
    %c0_i32_9 = arith.constant 0 : i32
    %11 = arith.cmpi ne, %10, %c0_i32_9 : i32
    scf.if %11 {
      %c0_10 = arith.constant 0 : index
      %c0_11 = arith.constant 0 : index
      %12 = vector.load %arg7[%c0_10, %c0_11] : memref<16x96xf32, #tpu.memory_space<vmem>>, vector<16x96xf32>
      %c0_12 = arith.constant 0 : index
      %c0_13 = arith.constant 0 : index
      %13 = vector.load %arg5[%c0_12, %c0_13] : memref<1x96xf32, #tpu.memory_space<vmem>>, vector<1x96xf32>
      %14 = vector.broadcast %13 : vector<1x96xf32> to vector<16x96xf32>
      %15 = arith.addf %12, %14 : vector<16x96xf32>
      %c0_14 = arith.constant 0 : index
      %c0_15 = arith.constant 0 : index
      %16 = vector.load %arg6[%c0_14, %c0_15] : memref<16x96xf32, #tpu.memory_space<vmem>>, vector<16x96xf32>
      tpu.vector_store %arg6[%c0_14, %c0_15], %15 {strides = array<i32>} : memref<16x96xf32, #tpu.memory_space<vmem>>, vector<16x96xf32>,
    } else {
    }
    return
  }
  func.func @transform_0(%arg0: i32, %arg1: i32, %arg2: i32) -> (i32, i32) {
    %c0_i32 = arith.constant 0 : i32
    return %arg0, %arg2 : i32, i32
  }
  func.func @transform_1(%arg0: i32, %arg1: i32, %arg2: i32) -> (i32, i32) {
    %c0_i32 = arith.constant 0 : i32
    return %arg2, %arg1 : i32, i32
  }
  func.func @transform_2(%arg0: i32, %arg1: i32, %arg2: i32) -> (i32, i32) {
    %c0_i32 = arith.constant 0 : i32
    %c0_i32_0 = arith.constant 0 : i32
    return %c0_i32, %arg1 : i32, i32
  }
  func.func @transform_3(%arg0: i32, %arg1: i32, %arg2: i32) -> (i32, i32) {
    %c0_i32 = arith.constant 0 : i32
    return %arg0, %arg1 : i32, i32
  }
}

</mosaic_0001>

<llo_original>
// kernel: tpu_custom_call.1
$region0: #{tpu_custom_call.1}
  #allocation0 [shape = 'u32[]', space=smem, size = 0x4, offset = 0x4, fixed_abs, tag = 'smem constant byte address 0x4 - core index']
  #allocation1 [shape = 'u32[144,128]{1,0:T(1,128)}', space=vmem, size = 0x12000, scoped, tag = 'internal scratch']
  #allocation2 [shape = 'f32[16,96]{1,0:T(8,128)}', space=vmem, size = 0x2000, scoped, tag = 'scratch operand']
  %s0 = inlined_call_operand.hbm [shape: f32[16,32], index: 0, kind: input, shape index: {}]
  %s1 = inlined_call_operand.hbm [shape: f32[32,96], index: 1, kind: input, shape index: {}]
  %s2 = inlined_call_operand.vmem [shape: f32[1,96], index: 2, kind: input, shape index: {}]
  %s3 = inlined_call_operand.hbm [shape: f32[16,96], index: 3, kind: output, shape index: {}]
  %s4 = sld [smem:[#allocation0]]
  $region38: #{tpu_custom_call.1} parent=0
    _
  %s6 = ssub.s32 1, %s4
  %s7 = scalar_select 0, %s6, %s4
  $region1: #{tpu_custom_call.1} parent=0
    #allocation3 [shape = 'u8[8192]{0}', space=vmem, size = 0x2000, scoped, tag = 'input window, operand 0, single buffered']
    #allocation4 [shape = 's32[1]{0}', space=sflag, size = 0x4, scoped, tag = 'scoped memory for tpu_custom_call.1']
    #allocation5 [shape = 's32[1]{0}', space=sflag, size = 0x4, scoped, tag = 'scoped memory for tpu_custom_call.1']
    #allocation6 [shape = 'u8[16384]{0}', space=vmem, size = 0x4000, scoped, tag = 'input window, operand 1, single buffered']
    #allocation7 [shape = 's32[1]{0}', space=sflag, size = 0x4, scoped, tag = 'scoped memory for tpu_custom_call.1']
    #allocation8 [shape = 'u8[8192]{0}', space=vmem, size = 0x2000, scoped, tag = 'output window, operand 0, single buffered']
    %8 = vsyncpa [#allocation4], 0
    %9 = vsyncpa [#allocation7], 0
    %10 = vsyncpa [#allocation5], 0
    // Predicated region
    $region2: #{tpu_custom_call.1} parent=1 // pred_check
      _
    $region3: #{tpu_custom_call.1} parent=1 // pred_check_branch
      %12 = sbr.rel (0) target = $region5
    $region4: #{tpu_custom_call.1} parent=1 // pred_region
      %s14 = ssub.s32 256, 256
      %15 = vsyncadd [#allocation4], %s14
      %s16 = sshll.u32 [#allocation3], 4
      %s17 = int_to_ptr.vmem [resolvable:$true] %s16
      %22 = dma.hbm_to_vmem [thread:$0]  %s0, 256, %s17, [#allocation4], 128, 128, 8
    $region5: #{tpu_custom_call.1} parent=1 // pred_fallthru
      _
    // Predicated region
    $region6: #{tpu_custom_call.1} parent=1 // pred_check
      _
    $region7: #{tpu_custom_call.1} parent=1 // pred_check_branch
      %24 = sbr.rel (0) target = $region9
    $region8: #{tpu_custom_call.1} parent=1 // pred_region
      %s26 = ssub.s32 512, 512
      %27 = vsyncadd [#allocation7], %s26
      %s28 = sshll.u32 [#allocation6], 4
      %s29 = int_to_ptr.vmem [resolvable:$true] %s28
      %34 = dma.hbm_to_vmem [thread:$0]  %s1, 512, %s29, [#allocation7], 128, 128, 8
    $region9: #{tpu_custom_call.1} parent=1 // pred_fallthru
      _
    // Predicated region
    $region10: #{tpu_custom_call.1} parent=1 // pred_check
      _
    $region11: #{tpu_custom_call.1} parent=1 // pred_check_branch
      %36 = sbr.rel (0) target = $region13
    $region12: #{tpu_custom_call.1} parent=1 // pred_region
      _
    $region13: #{tpu_custom_call.1} parent=1 // pred_fallthru
      _
    // Predicated region
    $region14: #{tpu_custom_call.1} parent=1 // pred_check
      _
    $region15: #{tpu_custom_call.1} parent=1 // pred_check_branch
      %38 = sbr.rel (0) target = $region17
    $region16: #{tpu_custom_call.1} parent=1 // pred_region
      %39 = dma.done [#allocation4], 256
    $region17: #{tpu_custom_call.1} parent=1 // pred_fallthru
      _
    // Predicated region
    $region18: #{tpu_custom_call.1} parent=1 // pred_check
      _
    $region19: #{tpu_custom_call.1} parent=1 // pred_check_branch
      %41 = sbr.rel (0) target = $region21
    $region20: #{tpu_custom_call.1} parent=1 // pred_region
      %42 = dma.done [#allocation7], 512
    $region21: #{tpu_custom_call.1} parent=1 // pred_fallthru
      _
    %p43 = scmp.eq.s32.totalorder 0, 0
    // Predicated region
    $region22: #{tpu_custom_call.1} parent=1 // pred_check
      %p44 = pneg %p43
    $region23: #{tpu_custom_call.1} parent=1 // pred_check_branch
      %46 = sbr.rel (%p44) target = $region25
    $region24: #{tpu_custom_call.1} parent=1 // pred_region
      %vm47 = vcmask 785408
      %48 = vst.msk [vmem:[#allocation2] sm:$0xff] %vm47, 0.0
      %49 = vst.msk [vmem:[#allocation2 + $0x8] sm:$0xff] %vm47, 0.0
    $region25: #{tpu_custom_call.1} parent=1 // pred_fallthru
      _
    %v50 = vld [vmem:[#allocation2] sm:$0xff]
    %v51 = vld [vmem:[#allocation2 + $0x8] sm:$0xff]
    %v52 = vld [vmem:[#allocation3] sm:$0xff]
    %v53 = vld [vmem:[#allocation3 + $0x8] sm:$0xff]
    %v54 = vld [vmem:[#allocation6] sm:$0xff]
    %v55 = vld [vmem:[#allocation6 + $0x8] sm:$0xff]
    %v56 = vld [vmem:[#allocation6 + $0x10] sm:$0xff]
    %v57 = vld [vmem:[#allocation6 + $0x18] sm:$0xff]
    %vm58 = vcmask 261120
    %v60 = vsel %vm58, %v52, 0
    %v63 = vsel %vm58, %v53, 0
    %65 = vmatprep.subr.mxu0 0.0
    %66 = vmatpush1.msra.mxu0 0.0
    %67 = vmatprep.subr.mxu0 0.0
    %68 = vmatpush1.msra.mxu0 0.0
    %69 = vmatprep.subr.mxu0 0.0
    %70 = vmatpush1.msra.mxu0 0.0
    %71 = vmatprep.subr.mxu0 0.0
    %72 = vmatpush1.msra.mxu0 0.0
    %73 = vmatprep.subr.mxu0 0.0
    %74 = vmatpush1.msra.mxu0 0.0
    %75 = vmatprep.subr.mxu0 0.0
    %76 = vmatpush1.msra.mxu0 0.0
    %77 = vmatprep.subr.mxu0 0.0
    %78 = vmatpush1.msra.mxu0 0.0
    %79 = vmatprep.subr.mxu0 0.0
    %80 = vmatpush1.msra.mxu0 0.0
    %81 = vmatprep.subr.mxu0 0.0
    %82 = vmatpush1.msra.mxu0 0.0
    %83 = vmatprep.subr.mxu0 0.0
    %84 = vmatpush1.msra.mxu0 0.0
    %85 = vmatprep.subr.mxu0 0.0
    %86 = vmatpush1.msra.mxu0 0.0
    %87 = vmatprep.subr.mxu0 0.0
    %88 = vmatpush1.msra.mxu0 0.0
    %89 = vmatprep.subr.mxu0 0.0
    %90 = vmatpush1.msra.mxu0 %v57
    %91 = vmatprep.subr.mxu0 0.0
    %92 = vmatpush1.msra.mxu0 %v56
    %93 = vmatprep.subr.mxu0 0.0
    %94 = vmatpush1.msra.mxu0 %v55
    %95 = vmatprep.subr.mxu0 0.0
    %96 = vmatpush1.msra.mxu0 %v54
    %97 = vmatprep.subr.mxu0 0.0
    %98 = vmatpush2.msra.mxu0 0.0
    %99 = vmatprep.subr.mxu0 0.0
    %100 = vmatpush2.msra.mxu0 0.0
    %101 = vmatprep.subr.mxu0 0.0
    %102 = vmatpush2.msra.mxu0 0.0
    %103 = vmatprep.subr.mxu0 0.0
    %104 = vmatpush2.msra.mxu0 0.0
    %105 = vmatprep.subr.mxu0 0.0
    %106 = vmatpush2.msra.mxu0 0.0
    %107 = vmatprep.subr.mxu0 0.0
    %108 = vmatpush2.msra.mxu0 0.0
    %109 = vmatprep.subr.mxu0 0.0
    %110 = vmatpush2.msra.mxu0 0.0
    %111 = vmatprep.subr.mxu0 0.0
    %112 = vmatpush2.msra.mxu0 0.0
    %113 = vmatprep.subr.mxu0 0.0
    %114 = vmatpush2.msra.mxu0 0.0
    %115 = vmatprep.subr.mxu0 0.0
    %116 = vmatpush2.msra.mxu0 0.0
    %117 = vmatprep.subr.mxu0 0.0
    %118 = vmatpush2.msra.mxu0 0.0
    %119 = vmatprep.subr.mxu0 0.0
    %120 = vmatpush2.msra.mxu0 0.0
    %121 = vmatprep.subr.mxu0 0.0
    %122 = vmatpush2.msra.mxu0 0.0
    %123 = vmatprep.subr.mxu0 0.0
    %124 = vmatpush2.msra.mxu0 0.0
    %125 = vmatprep.subr.mxu0 0.0
    %126 = vmatpush2.msra.mxu0 0.0
    %127 = vmatprep.subr.mxu0 0.0
    %128 = vmatpush2.msra.mxu0 0.0
    %129 = vmatprep.mubr.f32.mxu0 0.0
    %130 = vmatmul.mubr.f32.gmra.mxu0 %v60
    %v131 = vpop.f32.mrf.mxu0
    %v132 = vadd.f32 0.0, %v131
    %v133 = vpop.f32.mrf.mxu0
    %134 = vmatprep.mubr.f32.mxu0 0.0
    %135 = vmatmul.mubr.f32.gmra.mxu0 %v63
    %v136 = vpop.f32.mrf.mxu0
    %v137 = vadd.f32 0.0, %v136
    %v138 = vpop.f32.mrf.mxu0
    %139 = vdwg.mxu0
    %v140 = vadd.f32 %v50, %v132
    %v141 = vadd.f32 %v51, %v137
    %vm142 = vcmask 785408
    %143 = vst.msk [vmem:[#allocation2] sm:$0xff] %vm142, %v140
    %144 = vst.msk [vmem:[#allocation2 + $0x8] sm:$0xff] %vm142, %v141
    // Predicated region
    $region26: #{tpu_custom_call.1} parent=1 // pred_check
      %p145 = pneg %p43
    $region27: #{tpu_custom_call.1} parent=1 // pred_check_branch
      %147 = sbr.rel (%p145) target = $region29
    $region28: #{tpu_custom_call.1} parent=1 // pred_region
      %v148 = vld [vmem:[#allocation2] sm:$0xff]
      %v149 = vld [vmem:[#allocation2 + $0x8] sm:$0xff]
      %v150 = vld [vmem:[%s2] sm:$0x1]
      %v152 = vlaneseq
      %v153 = vshrl.u32 %v152, 7
      %v154 = vsub.s32 0, %v153
      %v155 = vrot.slane %v150, %v154
      %v157 = vadd.f32 %v148, %v155
      %v158 = vadd.f32 %v149, %v155
      %159 = vst.msk [vmem:[#allocation8] sm:$0xff] %vm142, %v157
      %160 = vst.msk [vmem:[#allocation8 + $0x8] sm:$0xff] %vm142, %v158
    $region29: #{tpu_custom_call.1} parent=1 // pred_fallthru
      _
    // Predicated region
    $region30: #{tpu_custom_call.1} parent=1 // pred_check
      _
    $region31: #{tpu_custom_call.1} parent=1 // pred_check_branch
      %162 = sbr.rel (0) target = $region33
    $region32: #{tpu_custom_call.1} parent=1 // pred_region
      %s164 = ssub.s32 256, 256
      %165 = vsyncadd [#allocation5], %s164
      %s166 = sshll.u32 [#allocation8], 4
      %s167 = int_to_ptr.vmem [resolvable:$true] %s166
      %172 = dma.vmem_to_hbm [thread:$0]  %s167, 256, %s3, [#allocation5], 128, 128, 8
    $region33: #{tpu_custom_call.1} parent=1 // pred_fallthru
      _
    // Predicated region
    $region34: #{tpu_custom_call.1} parent=1 // pred_check
      _
    $region35: #{tpu_custom_call.1} parent=1 // pred_check_branch
      %174 = sbr.rel (0) target = $region37
    $region36: #{tpu_custom_call.1} parent=1 // pred_region
      %175 = dma.done [#allocation5], 256
    $region37: #{tpu_custom_call.1} parent=1 // pred_fallthru
      _
    %176 = vsyncpa [#allocation4], 1
    %177 = vsyncpa [#allocation7], 1
    %178 = vsyncpa [#allocation5], 1

</llo_original>
